<compile_context>
chip_gen: v7x
topology: tpu7x:2x2x1
jax: 0.10.0
libtpu: 0.0.40
codegen_flags: <defaults>
</compile_context>

<pallas_src>
import jax
import jax.numpy as jnp
from jax.experimental import pallas as pl
from jax.experimental.pallas import tpu as pltpu


def _round_up(x: int, m: int) -> int:
    return ((x + m - 1) // m) * m


def _linear_kernel(x_ref, w_ref, b_ref, o_ref, acc_ref):
    """One (tm, tn) output tile; grid axis 2 is the K reduction."""
    k = pl.program_id(2)

    @pl.when(k == 0)
    def _init():
        acc_ref[...] = jnp.zeros_like(acc_ref)

    # x_ref: (tm, tk), w_ref: (tk, tn) -> MXU matmul, f32 accumulate.
    acc_ref[...] += jnp.dot(
        x_ref[...], w_ref[...], preferred_element_type=jnp.float32
    )

    @pl.when(k == pl.num_programs(2) - 1)
    def _finalize():
        # Bias add + writeback only once, on the last K step.
        o_ref[...] = (acc_ref[...] + b_ref[...].astype(jnp.float32)).astype(
            o_ref.dtype
        )


def linear_forward(x, weight, bias, *, tm=None, tn=None, tk=None,
                   compute_dtype=None):
    """Pallas equivalent of torch.nn.Linear.forward: x @ W^T + b.

    x:      (M, K)      weight: (N, K)  (torch layout)   bias: (N,)
    Returns (M, N) in x.dtype.
    """
    M, K = x.shape
    N, K_w = weight.shape
    assert K == K_w, "weight in_features mismatch"
    out_dtype = x.dtype

    # --- tile selection (VMEM-friendly on all generations, incl. v7x 64 MiB) ---
    if tm is None:
        tm = min(256, _round_up(M, 8))
    if tn is None:
        tn = min(256, _round_up(N, 128))
    if tk is None:
        tk = min(512, _round_up(K, 128))
    tm = _round_up(tm, 8)
    tn = _round_up(tn, 128)
    tk = _round_up(tk, 128)

    M_pad = _round_up(M, tm)
    N_pad = _round_up(N, tn)
    K_pad = _round_up(K, tk)

    # --- layout prep in the wrapper (done once, outside the kernel) ---
    # Pre-transpose the weight so the kernel never transposes on the XLU, and
    # zero-pad so every block is full and the output lane dim is 128-dense.
    x_p = jnp.pad(x, ((0, M_pad - M), (0, K_pad - K)))
    w_t = jnp.pad(weight.T, ((0, K_pad - K), (0, N_pad - N)))      # (K_pad, N_pad)
    b_p = jnp.pad(bias.reshape(1, N), ((0, 0), (0, N_pad - N)))    # (1, N_pad)

    if compute_dtype is not None:
        x_p = x_p.astype(compute_dtype)
        w_t = w_t.astype(compute_dtype)

    grid = (M_pad // tm, N_pad // tn, K_pad // tk)

    out = pl.pallas_call(
        _linear_kernel,
        out_shape=jax.ShapeDtypeStruct((M_pad, N_pad), out_dtype),
        grid_spec=pltpu.PrefetchScalarGridSpec(
            num_scalar_prefetch=0,
            grid=grid,
            in_specs=[
                pl.BlockSpec((tm, tk), lambda i, j, k: (i, k)),   # x tile
                pl.BlockSpec((tk, tn), lambda i, j, k: (k, j)),   # W^T tile
                pl.BlockSpec((1, tn), lambda i, j, k: (0, j)),    # bias tile
            ],
            out_specs=pl.BlockSpec((tm, tn), lambda i, j, k: (i, j)),
            scratch_shapes=[pltpu.VMEM((tm, tn), jnp.float32)],
        ),
        compiler_params=pltpu.CompilerParams(
            dimension_semantics=("parallel", "parallel", "arbitrary"),
        ),
    )(x_p, w_t, b_p)

    return out[:M, :N]


if __name__ == "__main__":
    key = jax.random.PRNGKey(0)
    k1, k2, k3, k4, k5, k6 = jax.random.split(key, 6)

    # ---------------------------------------------------------------
    # Test 1: small, unaligned shapes close to the original module
    # (exercises the padding / masked-free store path). grid = (1,1,1).
    # ---------------------------------------------------------------
    batch, input_size, output_size = 100, 48, 24
    bound = 1.0 / (input_size ** 0.5)
    weight = jax.random.uniform(
        k1, (output_size, input_size), minval=-bound, maxval=bound,
        dtype=jnp.float32)
    bias = jax.random.uniform(
        k2, (output_size,), minval=-bound, maxval=bound, dtype=jnp.float32)
    x = jax.random.normal(k3, (batch, input_size), dtype=jnp.float32) * 10.0

    pred = jax.block_until_ready(linear_forward(x, weight, bias))
    ref = jnp.matmul(x, weight.T, precision=jax.lax.Precision.HIGHEST) + bias
    assert pred.shape == (batch, output_size)
    assert jnp.allclose(pred, ref, atol=1e-3, rtol=1e-4), "mismatch (test 1)"

    # ---------------------------------------------------------------
    # Test 2: aligned shapes with explicit tiles -> real (2, 2, 2) grid,
    # exercising the K-reduction accumulator init / bias-on-last-k path
    # and both "parallel" output axes.
    # ---------------------------------------------------------------
    batch2, in2, out2 = 256, 512, 256
    bound2 = 1.0 / (in2 ** 0.5)
    w2 = jax.random.uniform(
        k4, (out2, in2), minval=-bound2, maxval=bound2, dtype=jnp.float32)
    b2 = jax.random.uniform(
        k5, (out2,), minval=-bound2, maxval=bound2, dtype=jnp.float32)
    x2 = jax.random.normal(k6, (batch2, in2), dtype=jnp.float32)

    pred2 = jax.block_until_ready(
        linear_forward(x2, w2, b2, tm=128, tn=128, tk=256))
    ref2 = jnp.matmul(x2, w2.T, precision=jax.lax.Precision.HIGHEST) + b2
    assert pred2.shape == (batch2, out2)
    assert jnp.allclose(pred2, ref2, atol=1e-3, rtol=1e-4), "mismatch (test 2)"

    print("KERNEL_OK")
</pallas_src>

<mosaic_0001>
module attributes {stable_mosaic.version = 11 : i64} {
  func.func @_linear_kernel(%arg0: i32, %arg1: i32, %arg2: i32, %arg3: memref<104x128xf32, #tpu.memory_space<vmem>>, %arg4: memref<128x128xf32, #tpu.memory_space<vmem>>, %arg5: memref<1x128xf32, #tpu.memory_space<vmem>>, %arg6: memref<104x128xf32, #tpu.memory_space<vmem>>, %arg7: memref<104x128xf32, #tpu.memory_space<vmem>>) attributes {dimension_semantics = [#tpu.dimension_semantics<parallel>, #tpu.dimension_semantics<parallel>, #tpu.dimension_semantics<arbitrary>], iteration_bounds = array<i64: 1, 1, 1>, scalar_prefetch = 0 : i64, scratch_operands = 1 : i64, tpu.core_type = #tpu.core_type<tc>, window_params = [{transform_indices = @transform_0, window_bounds = array<i64: 104, 128>}, {transform_indices = @transform_1, window_bounds = array<i64: 128, 128>}, {transform_indices = @transform_2, window_bounds = array<i64: 1, 128>}, {transform_indices = @transform_3, window_bounds = array<i64: 104, 128>}]} {
    %c0_i32 = arith.constant 0 : i32
    %0 = arith.cmpi eq, %arg2, %c0_i32 : i32
    %1 = arith.extui %0 : i1 to i32
    %c0_i32_0 = arith.constant 0 : i32
    %2 = arith.cmpi ne, %1, %c0_i32_0 : i32
    scf.if %2 {
      %cst_10 = arith.constant 0.000000e+00 : f32
      %12 = vector.broadcast %cst_10 : f32 to vector<104x128xf32>
      %c0_11 = arith.constant 0 : index
      %c0_12 = arith.constant 0 : index
      %13 = vector.load %arg7[%c0_11, %c0_12] : memref<104x128xf32, #tpu.memory_space<vmem>>, vector<104x128xf32>
      tpu.vector_store %arg7[%c0_11, %c0_12], %12 {strides = array<i32>} : memref<104x128xf32, #tpu.memory_space<vmem>>, vector<104x128xf32>,
    } else {
    }
    %c0 = arith.constant 0 : index
    %c0_1 = arith.constant 0 : index
    %3 = vector.load %arg7[%c0, %c0_1] : memref<104x128xf32, #tpu.memory_space<vmem>>, vector<104x128xf32>
    %c0_2 = arith.constant 0 : index
    %c0_3 = arith.constant 0 : index
    %4 = vector.load %arg3[%c0_2, %c0_3] : memref<104x128xf32, #tpu.memory_space<vmem>>, vector<104x128xf32>
    %c0_4 = arith.constant 0 : index
    %c0_5 = arith.constant 0 : index
    %5 = vector.load %arg4[%c0_4, %c0_5] : memref<128x128xf32, #tpu.memory_space<vmem>>, vector<128x128xf32>
    %cst = arith.constant dense<0.000000e+00> : vector<104x128xf32>
    %6 = tpu.matmul %4, %5, %cst {dimension_numbers = #tpu.dot_dimension_numbers<[1], [0], [0], [1], [0, 0, 1, 1], [], []>} : vector<104x128xf32>, vector<128x128xf32>, vector<104x128xf32> -> vector<104x128xf32>
    %7 = arith.addf %3, %6 : vector<104x128xf32>
    %c0_6 = arith.constant 0 : index
    %c0_7 = arith.constant 0 : index
    %8 = vector.load %arg7[%c0_6, %c0_7] : memref<104x128xf32, #tpu.memory_space<vmem>>, vector<104x128xf32>
    tpu.vector_store %arg7[%c0_6, %c0_7], %7 {strides = array<i32>} : memref<104x128xf32, #tpu.memory_space<vmem>>, vector<104x128xf32>,
    %c0_i32_8 = arith.constant 0 : i32
    %9 = arith.cmpi eq, %arg2, %c0_i32_8 : i32
    %10 = arith.extui %9 : i1 to i32
    %c0_i32_9 = arith.constant 0 : i32
    %11 = arith.cmpi ne, %10, %c0_i32_9 : i32
    scf.if %11 {
      %c0_10 = arith.constant 0 : index
      %c0_11 = arith.constant 0 : index
      %12 = vector.load %arg7[%c0_10, %c0_11] : memref<104x128xf32, #tpu.memory_space<vmem>>, vector<104x128xf32>
      %c0_12 = arith.constant 0 : index
      %c0_13 = arith.constant 0 : index
      %13 = vector.load %arg5[%c0_12, %c0_13] : memref<1x128xf32, #tpu.memory_space<vmem>>, vector<1x128xf32>
      %14 = vector.broadcast %13 : vector<1x128xf32> to vector<104x128xf32>
      %15 = arith.addf %12, %14 : vector<104x128xf32>
      %c0_14 = arith.constant 0 : index
      %c0_15 = arith.constant 0 : index
      %16 = vector.load %arg6[%c0_14, %c0_15] : memref<104x128xf32, #tpu.memory_space<vmem>>, vector<104x128xf32>
      tpu.vector_store %arg6[%c0_14, %c0_15], %15 {strides = array<i32>} : memref<104x128xf32, #tpu.memory_space<vmem>>, vector<104x128xf32>,
    } else {
    }
    return
  }
  func.func @transform_0(%arg0: i32, %arg1: i32, %arg2: i32) -> (i32, i32) {
    %c0_i32 = arith.constant 0 : i32
    return %arg0, %arg2 : i32, i32
  }
  func.func @transform_1(%arg0: i32, %arg1: i32, %arg2: i32) -> (i32, i32) {
    %c0_i32 = arith.constant 0 : i32
    return %arg2, %arg1 : i32, i32
  }
  func.func @transform_2(%arg0: i32, %arg1: i32, %arg2: i32) -> (i32, i32) {
    %c0_i32 = arith.constant 0 : i32
    %c0_i32_0 = arith.constant 0 : i32
    return %c0_i32, %arg1 : i32, i32
  }
  func.func @transform_3(%arg0: i32, %arg1: i32, %arg2: i32) -> (i32, i32) {
    %c0_i32 = arith.constant 0 : i32
    return %arg0, %arg1 : i32, i32
  }
}

</mosaic_0001>

<llo_original>
// kernel: tpu_custom_call.1
$region0: #{tpu_custom_call.1}
  #allocation0 [shape = 'u32[]', space=smem, size = 0x4, offset = 0x4, fixed_abs, tag = 'smem constant byte address 0x4 - core index']
  #allocation1 [shape = 'u32[144,128]{1,0:T(1,128)}', space=vmem, size = 0x12000, scoped, tag = 'internal scratch']
  #allocation2 [shape = 'f32[104,128]{1,0:T(8,128)}', space=vmem, size = 0xd000, scoped, tag = 'scratch operand']
  %s0 = inlined_call_operand.hbm [shape: f32[104,128], index: 0, kind: input, shape index: {}]
  %s1 = inlined_call_operand.hbm [shape: f32[128,128], index: 1, kind: input, shape index: {}]
  %s2 = inlined_call_operand.vmem [shape: f32[1,128], index: 2, kind: input, shape index: {}]
  %s3 = inlined_call_operand.hbm [shape: f32[104,128], index: 3, kind: output, shape index: {}]
  %s4 = sld [smem:[#allocation0]]
  $region38: #{tpu_custom_call.1} parent=0
    _
  %s6 = ssub.s32 1, %s4
  %s7 = scalar_select 0, %s6, %s4
  $region1: #{tpu_custom_call.1} parent=0
    #allocation3 [shape = 'u8[53248]{0}', space=vmem, size = 0xd000, scoped, tag = 'input window, operand 0, single buffered']
    #allocation4 [shape = 's32[1]{0}', space=sflag, size = 0x4, scoped, tag = 'scoped memory for tpu_custom_call.1']
    #allocation5 [shape = 's32[1]{0}', space=sflag, size = 0x4, scoped, tag = 'scoped memory for tpu_custom_call.1']
    #allocation6 [shape = 'u8[65536]{0}', space=vmem, size = 0x10000, scoped, tag = 'input window, operand 1, single buffered']
    #allocation7 [shape = 's32[1]{0}', space=sflag, size = 0x4, scoped, tag = 'scoped memory for tpu_custom_call.1']
    #allocation8 [shape = 'u8[53248]{0}', space=vmem, size = 0xd000, scoped, tag = 'output window, operand 0, single buffered']
    %8 = vsyncpa [#allocation4], 0
    %9 = vsyncpa [#allocation7], 0
    %10 = vsyncpa [#allocation5], 0
    // Predicated region
    $region2: #{tpu_custom_call.1} parent=1 // pred_check
      _
    $region3: #{tpu_custom_call.1} parent=1 // pred_check_branch
      %12 = sbr.rel (0) target = $region5
    $region4: #{tpu_custom_call.1} parent=1 // pred_region
      %s14 = ssub.s32 1664, 1664
      %15 = vsyncadd [#allocation4], %s14
      %s16 = sshll.u32 [#allocation3], 4
      %s17 = int_to_ptr.vmem [resolvable:$true] %s16
      %22 = dma.hbm_to_vmem [thread:$0]  %s0, 1664, %s17, [#allocation4], 128, 128, 8
    $region5: #{tpu_custom_call.1} parent=1 // pred_fallthru
      _
    // Predicated region
    $region6: #{tpu_custom_call.1} parent=1 // pred_check
      _
    $region7: #{tpu_custom_call.1} parent=1 // pred_check_branch
      %24 = sbr.rel (0) target = $region9
    $region8: #{tpu_custom_call.1} parent=1 // pred_region
      %s26 = ssub.s32 2048, 2048
      %27 = vsyncadd [#allocation7], %s26
      %s28 = sshll.u32 [#allocation6], 4
      %s29 = int_to_ptr.vmem [resolvable:$true] %s28
      %34 = dma.hbm_to_vmem [thread:$0]  %s1, 2048, %s29, [#allocation7], 128, 128, 8
    $region9: #{tpu_custom_call.1} parent=1 // pred_fallthru
      _
    // Predicated region
    $region10: #{tpu_custom_call.1} parent=1 // pred_check
      _
    $region11: #{tpu_custom_call.1} parent=1 // pred_check_branch
      %36 = sbr.rel (0) target = $region13
    $region12: #{tpu_custom_call.1} parent=1 // pred_region
      _
    $region13: #{tpu_custom_call.1} parent=1 // pred_fallthru
      _
    // Predicated region
    $region14: #{tpu_custom_call.1} parent=1 // pred_check
      _
    $region15: #{tpu_custom_call.1} parent=1 // pred_check_branch
      %38 = sbr.rel (0) target = $region17
    $region16: #{tpu_custom_call.1} parent=1 // pred_region
      %39 = dma.done [#allocation4], 1664
    $region17: #{tpu_custom_call.1} parent=1 // pred_fallthru
      _
    // Predicated region
    $region18: #{tpu_custom_call.1} parent=1 // pred_check
      _
    $region19: #{tpu_custom_call.1} parent=1 // pred_check_branch
      %41 = sbr.rel (0) target = $region21
    $region20: #{tpu_custom_call.1} parent=1 // pred_region
      %42 = dma.done [#allocation7], 2048
    $region21: #{tpu_custom_call.1} parent=1 // pred_fallthru
      _
    %p43 = scmp.eq.s32.totalorder 0, 0
    // Predicated region
    $region22: #{tpu_custom_call.1} parent=1 // pred_check
      %p44 = pneg %p43
    $region23: #{tpu_custom_call.1} parent=1 // pred_check_branch
      %46 = sbr.rel (%p44) target = $region25
    $region24: #{tpu_custom_call.1} parent=1 // pred_region
      %47 = vst [vmem:[#allocation2] sm:$0xff] 0.0
      %48 = vst [vmem:[#allocation2 + $0x8] sm:$0xff] 0.0
      %49 = vst [vmem:[#allocation2 + $0x10] sm:$0xff] 0.0
      %50 = vst [vmem:[#allocation2 + $0x18] sm:$0xff] 0.0
      %51 = vst [vmem:[#allocation2 + $0x20] sm:$0xff] 0.0
      %52 = vst [vmem:[#allocation2 + $0x28] sm:$0xff] 0.0
      %53 = vst [vmem:[#allocation2 + $0x30] sm:$0xff] 0.0
      %54 = vst [vmem:[#allocation2 + $0x38] sm:$0xff] 0.0
      %55 = vst [vmem:[#allocation2 + $0x40] sm:$0xff] 0.0
      %56 = vst [vmem:[#allocation2 + $0x48] sm:$0xff] 0.0
      %57 = vst [vmem:[#allocation2 + $0x50] sm:$0xff] 0.0
      %58 = vst [vmem:[#allocation2 + $0x58] sm:$0xff] 0.0
      %59 = vst [vmem:[#allocation2 + $0x60] sm:$0xff] 0.0
    $region25: #{tpu_custom_call.1} parent=1 // pred_fallthru
      _
    %v60 = vld [vmem:[#allocation2] sm:$0xff]
    %v61 = vld [vmem:[#allocation2 + $0x8] sm:$0xff]
    %v62 = vld [vmem:[#allocation2 + $0x10] sm:$0xff]
    %v63 = vld [vmem:[#allocation2 + $0x18] sm:$0xff]
    %v64 = vld [vmem:[#allocation2 + $0x20] sm:$0xff]
    %v65 = vld [vmem:[#allocation2 + $0x28] sm:$0xff]
    %v66 = vld [vmem:[#allocation2 + $0x30] sm:$0xff]
    %v67 = vld [vmem:[#allocation2 + $0x38] sm:$0xff]
    %v68 = vld [vmem:[#allocation2 + $0x40] sm:$0xff]
    %v69 = vld [vmem:[#allocation2 + $0x48] sm:$0xff]
    %v70 = vld [vmem:[#allocation2 + $0x50] sm:$0xff]
    %v71 = vld [vmem:[#allocation2 + $0x58] sm:$0xff]
    %v72 = vld [vmem:[#allocation2 + $0x60] sm:$0xff]
    %v73 = vld [vmem:[#allocation3] sm:$0xff]
    %v74 = vld [vmem:[#allocation3 + $0x8] sm:$0xff]
    %v75 = vld [vmem:[#allocation3 + $0x10] sm:$0xff]
    %v76 = vld [vmem:[#allocation3 + $0x18] sm:$0xff]
    %v77 = vld [vmem:[#allocation3 + $0x20] sm:$0xff]
    %v78 = vld [vmem:[#allocation3 + $0x28] sm:$0xff]
    %v79 = vld [vmem:[#allocation3 + $0x30] sm:$0xff]
    %v80 = vld [vmem:[#allocation3 + $0x38] sm:$0xff]
    %v81 = vld [vmem:[#allocation3 + $0x40] sm:$0xff]
    %v82 = vld [vmem:[#allocation3 + $0x48] sm:$0xff]
    %v83 = vld [vmem:[#allocation3 + $0x50] sm:$0xff]
    %v84 = vld [vmem:[#allocation3 + $0x58] sm:$0xff]
    %v85 = vld [vmem:[#allocation3 + $0x60] sm:$0xff]
    %v86 = vld [vmem:[#allocation6] sm:$0xff]
    %v87 = vld [vmem:[#allocation6 + $0x8] sm:$0xff]
    %v88 = vld [vmem:[#allocation6 + $0x10] sm:$0xff]
    %v89 = vld [vmem:[#allocation6 + $0x18] sm:$0xff]
    %v90 = vld [vmem:[#allocation6 + $0x20] sm:$0xff]
    %v91 = vld [vmem:[#allocation6 + $0x28] sm:$0xff]
    %v92 = vld [vmem:[#allocation6 + $0x30] sm:$0xff]
    %v93 = vld [vmem:[#allocation6 + $0x38] sm:$0xff]
    %v94 = vld [vmem:[#allocation6 + $0x40] sm:$0xff]
    %v95 = vld [vmem:[#allocation6 + $0x48] sm:$0xff]
    %v96 = vld [vmem:[#allocation6 + $0x50] sm:$0xff]
    %v97 = vld [vmem:[#allocation6 + $0x58] sm:$0xff]
    %v98 = vld [vmem:[#allocation6 + $0x60] sm:$0xff]
    %v99 = vld [vmem:[#allocation6 + $0x68] sm:$0xff]
    %v100 = vld [vmem:[#allocation6 + $0x70] sm:$0xff]
    %v101 = vld [vmem:[#allocation6 + $0x78] sm:$0xff]
    %102 = vmatprep.subr.mxu0 0.0
    %103 = vmatpush1.msra.mxu0 %v86
    %104 = vmatprep.subr.mxu0 0.0
    %105 = vmatpush1.msra.mxu0 %v87
    %106 = vmatprep.subr.mxu0 0.0
    %107 = vmatpush1.msra.mxu0 %v88
    %108 = vmatprep.subr.mxu0 0.0
    %109 = vmatpush1.msra.mxu0 %v89
    %110 = vmatprep.subr.mxu0 0.0
    %111 = vmatpush1.msra.mxu0 %v90
    %112 = vmatprep.subr.mxu0 0.0
    %113 = vmatpush1.msra.mxu0 %v91
    %114 = vmatprep.subr.mxu0 0.0
    %115 = vmatpush1.msra.mxu0 %v92
    %116 = vmatprep.subr.mxu0 0.0
    %117 = vmatpush1.msra.mxu0 %v93
    %118 = vmatprep.subr.mxu0 0.0
    %119 = vmatpush1.msra.mxu0 %v94
    %120 = vmatprep.subr.mxu0 0.0
    %121 = vmatpush1.msra.mxu0 %v95
    %122 = vmatprep.subr.mxu0 0.0
    %123 = vmatpush1.msra.mxu0 %v96
    %124 = vmatprep.subr.mxu0 0.0
    %125 = vmatpush1.msra.mxu0 %v97
    %126 = vmatprep.subr.mxu0 0.0
    %127 = vmatpush1.msra.mxu0 %v98
    %128 = vmatprep.subr.mxu0 0.0
    %129 = vmatpush1.msra.mxu0 %v99
    %130 = vmatprep.subr.mxu0 0.0
    %131 = vmatpush1.msra.mxu0 %v100
    %132 = vmatprep.subr.mxu0 0.0
    %133 = vmatpush1.msra.mxu0 %v101
    %134 = vmatprep.subr.mxu0 0.0
    %135 = vmatpush1.msra.mxu0 0.0
    %136 = vmatprep.subr.mxu0 0.0
    %137 = vmatpush1.msra.mxu0 0.0
    %138 = vmatprep.subr.mxu0 0.0
    %139 = vmatpush1.msra.mxu0 0.0
    %140 = vmatprep.subr.mxu0 0.0
    %141 = vmatpush1.msra.mxu0 0.0
    %142 = vmatprep.subr.mxu0 0.0
    %143 = vmatpush1.msra.mxu0 0.0
    %144 = vmatprep.subr.mxu0 0.0
    %145 = vmatpush1.msra.mxu0 0.0
    %146 = vmatprep.subr.mxu0 0.0
    %147 = vmatpush1.msra.mxu0 0.0
    %148 = vmatprep.subr.mxu0 0.0
    %149 = vmatpush1.msra.mxu0 0.0
    %150 = vmatprep.subr.mxu0 0.0
    %151 = vmatpush1.msra.mxu0 0.0
    %152 = vmatprep.subr.mxu0 0.0
    %153 = vmatpush1.msra.mxu0 0.0
    %154 = vmatprep.subr.mxu0 0.0
    %155 = vmatpush1.msra.mxu0 0.0
    %156 = vmatprep.subr.mxu0 0.0
    %157 = vmatpush1.msra.mxu0 0.0
    %158 = vmatprep.subr.mxu0 0.0
    %159 = vmatpush1.msra.mxu0 0.0
    %160 = vmatprep.subr.mxu0 0.0
    %161 = vmatpush1.msra.mxu0 0.0
    %162 = vmatprep.subr.mxu0 0.0
    %163 = vmatpush1.msra.mxu0 0.0
    %164 = vmatprep.subr.mxu0 0.0
    %165 = vmatpush1.msra.mxu0 0.0
    %166 = vmatprep.mubr.f32.mxu0 0.0
    %167 = vmatmul.mubr.f32.gmra.mrb[0].mxu0 %v73
    %v168 = vpop.f32.mrb[0].mxu0
    %v169 = vadd.f32 0.0, %v168
    %v170 = vpop.f32.mrb[0].mxu0
    %171 = vmatprep.mubr.f32.mxu0 0.0
    %172 = vmatmul.mubr.f32.gmra.mrb[0].mxu0 %v74
    %v173 = vpop.f32.mrb[0].mxu0
    %v174 = vadd.f32 0.0, %v173
    %v175 = vpop.f32.mrb[0].mxu0
    %176 = vmatprep.mubr.f32.mxu0 0.0
    %177 = vmatmul.mubr.f32.gmra.mrb[0].mxu0 %v75
    %v178 = vpop.f32.mrb[0].mxu0
    %v179 = vadd.f32 0.0, %v178
    %v180 = vpop.f32.mrb[0].mxu0
    %181 = vmatprep.mubr.f32.mxu0 0.0
    %182 = vmatmul.mubr.f32.gmra.mrb[0].mxu0 %v76
    %v183 = vpop.f32.mrb[0].mxu0
    %v184 = vadd.f32 0.0, %v183
    %v185 = vpop.f32.mrb[0].mxu0
    %186 = vmatprep.mubr.f32.mxu0 0.0
    %187 = vmatmul.mubr.f32.gmra.mrb[0].mxu0 %v77
    %v188 = vpop.f32.mrb[0].mxu0
    %v189 = vadd.f32 0.0, %v188
    %v190 = vpop.f32.mrb[0].mxu0
    %191 = vmatprep.mubr.f32.mxu0 0.0
    %192 = vmatmul.mubr.f32.gmra.mrb[0].mxu0 %v78
    %v193 = vpop.f32.mrb[0].mxu0
    %v194 = vadd.f32 0.0, %v193
    %v195 = vpop.f32.mrb[0].mxu0
    %196 = vmatprep.mubr.f32.mxu0 0.0
    %197 = vmatmul.mubr.f32.gmra.mrb[0].mxu0 %v79
    %v198 = vpop.f32.mrb[0].mxu0
    %v199 = vadd.f32 0.0, %v198
    %v200 = vpop.f32.mrb[0].mxu0
    %201 = vmatprep.mubr.f32.mxu0 0.0
    %202 = vmatmul.mubr.f32.gmra.mrb[0].mxu0 %v80
    %v203 = vpop.f32.mrb[0].mxu0
    %v204 = vadd.f32 0.0, %v203
    %v205 = vpop.f32.mrb[0].mxu0
    %206 = vmatprep.mubr.f32.mxu0 0.0
    %207 = vmatmul.mubr.f32.gmra.mrb[0].mxu0 %v81
    %v208 = vpop.f32.mrb[0].mxu0
    %v209 = vadd.f32 0.0, %v208
    %v210 = vpop.f32.mrb[0].mxu0
    %211 = vmatprep.mubr.f32.mxu0 0.0
    %212 = vmatmul.mubr.f32.gmra.mrb[0].mxu0 %v82
    %v213 = vpop.f32.mrb[0].mxu0
    %v214 = vadd.f32 0.0, %v213
    %v215 = vpop.f32.mrb[0].mxu0
    %216 = vmatprep.mubr.f32.mxu0 0.0
    %217 = vmatmul.mubr.f32.gmra.mrb[0].mxu0 %v83
    %v218 = vpop.f32.mrb[0].mxu0
    %v219 = vadd.f32 0.0, %v218
    %v220 = vpop.f32.mrb[0].mxu0
    %221 = vmatprep.mubr.f32.mxu0 0.0
    %222 = vmatmul.mubr.f32.gmra.mrb[0].mxu0 %v84
    %v223 = vpop.f32.mrb[0].mxu0
    %v224 = vadd.f32 0.0, %v223
    %v225 = vpop.f32.mrb[0].mxu0
    %226 = vmatprep.mubr.f32.mxu0 0.0
    %227 = vmatmul.mubr.f32.gmra.mrb[0].mxu0 %v85
    %v228 = vpop.f32.mrb[0].mxu0
    %v229 = vadd.f32 0.0, %v228
    %v230 = vpop.f32.mrb[0].mxu0
    %231 = vdwg.mxu0
    %v232 = vadd.f32 %v60, %v169
    %v233 = vadd.f32 %v61, %v174
    %v234 = vadd.f32 %v62, %v179
    %v235 = vadd.f32 %v63, %v184
    %v236 = vadd.f32 %v64, %v189
    %v237 = vadd.f32 %v65, %v194
    %v238 = vadd.f32 %v66, %v199
    %v239 = vadd.f32 %v67, %v204
    %v240 = vadd.f32 %v68, %v209
    %v241 = vadd.f32 %v69, %v214
    %v242 = vadd.f32 %v70, %v219
    %v243 = vadd.f32 %v71, %v224
    %v244 = vadd.f32 %v72, %v229
    %245 = vst [vmem:[#allocation2] sm:$0xff] %v232
    %246 = vst [vmem:[#allocation2 + $0x8] sm:$0xff] %v233
    %247 = vst [vmem:[#allocation2 + $0x10] sm:$0xff] %v234
    %248 = vst [vmem:[#allocation2 + $0x18] sm:$0xff] %v235
    %249 = vst [vmem:[#allocation2 + $0x20] sm:$0xff] %v236
    %250 = vst [vmem:[#allocation2 + $0x28] sm:$0xff] %v237
    %251 = vst [vmem:[#allocation2 + $0x30] sm:$0xff] %v238
    %252 = vst [vmem:[#allocation2 + $0x38] sm:$0xff] %v239
    %253 = vst [vmem:[#allocation2 + $0x40] sm:$0xff] %v240
    %254 = vst [vmem:[#allocation2 + $0x48] sm:$0xff] %v241
    %255 = vst [vmem:[#allocation2 + $0x50] sm:$0xff] %v242
    %256 = vst [vmem:[#allocation2 + $0x58] sm:$0xff] %v243
    %257 = vst [vmem:[#allocation2 + $0x60] sm:$0xff] %v244
    // Predicated region
    $region26: #{tpu_custom_call.1} parent=1 // pred_check
      %p258 = pneg %p43
    $region27: #{tpu_custom_call.1} parent=1 // pred_check_branch
      %260 = sbr.rel (%p258) target = $region29
    $region28: #{tpu_custom_call.1} parent=1 // pred_region
      %v261 = vld [vmem:[#allocation2] sm:$0xff]
      %v262 = vld [vmem:[#allocation2 + $0x8] sm:$0xff]
      %v263 = vld [vmem:[#allocation2 + $0x10] sm:$0xff]
      %v264 = vld [vmem:[#allocation2 + $0x18] sm:$0xff]
      %v265 = vld [vmem:[#allocation2 + $0x20] sm:$0xff]
      %v266 = vld [vmem:[#allocation2 + $0x28] sm:$0xff]
      %v267 = vld [vmem:[#allocation2 + $0x30] sm:$0xff]
      %v268 = vld [vmem:[#allocation2 + $0x38] sm:$0xff]
      %v269 = vld [vmem:[#allocation2 + $0x40] sm:$0xff]
      %v270 = vld [vmem:[#allocation2 + $0x48] sm:$0xff]
      %v271 = vld [vmem:[#allocation2 + $0x50] sm:$0xff]
      %v272 = vld [vmem:[#allocation2 + $0x58] sm:$0xff]
      %v273 = vld [vmem:[#allocation2 + $0x60] sm:$0xff]
      %v274 = vld [vmem:[%s2] sm:$0x1]
      %v276 = vlaneseq
      %v277 = vshrl.u32 %v276, 7
      %v278 = vsub.s32 0, %v277
      %v279 = vrot.slane %v274, %v278
      %v281 = vadd.f32 %v261, %v279
      %v282 = vadd.f32 %v262, %v279
      %v283 = vadd.f32 %v263, %v279
      %v284 = vadd.f32 %v264, %v279
      %v285 = vadd.f32 %v265, %v279
      %v286 = vadd.f32 %v266, %v279
      %v287 = vadd.f32 %v267, %v279
      %v288 = vadd.f32 %v268, %v279
      %v289 = vadd.f32 %v269, %v279
      %v290 = vadd.f32 %v270, %v279
      %v291 = vadd.f32 %v271, %v279
      %v292 = vadd.f32 %v272, %v279
      %v293 = vadd.f32 %v273, %v279
      %294 = vst [vmem:[#allocation8] sm:$0xff] %v281
      %295 = vst [vmem:[#allocation8 + $0x8] sm:$0xff] %v282
      %296 = vst [vmem:[#allocation8 + $0x10] sm:$0xff] %v283
      %297 = vst [vmem:[#allocation8 + $0x18] sm:$0xff] %v284
      %298 = vst [vmem:[#allocation8 + $0x20] sm:$0xff] %v285
      %299 = vst [vmem:[#allocation8 + $0x28] sm:$0xff] %v286
      %300 = vst [vmem:[#allocation8 + $0x30] sm:$0xff] %v287
      %301 = vst [vmem:[#allocation8 + $0x38] sm:$0xff] %v288
      %302 = vst [vmem:[#allocation8 + $0x40] sm:$0xff] %v289
      %303 = vst [vmem:[#allocation8 + $0x48] sm:$0xff] %v290
      %304 = vst [vmem:[#allocation8 + $0x50] sm:$0xff] %v291
      %305 = vst [vmem:[#allocation8 + $0x58] sm:$0xff] %v292
      %306 = vst [vmem:[#allocation8 + $0x60] sm:$0xff] %v293
    $region29: #{tpu_custom_call.1} parent=1 // pred_fallthru
      _
    // Predicated region
    $region30: #{tpu_custom_call.1} parent=1 // pred_check
      _
    $region31: #{tpu_custom_call.1} parent=1 // pred_check_branch
      %308 = sbr.rel (0) target = $region33
    $region32: #{tpu_custom_call.1} parent=1 // pred_region
      %s310 = ssub.s32 1664, 1664
      %311 = vsyncadd [#allocation5], %s310
      %s312 = sshll.u32 [#allocation8], 4
      %s313 = int_to_ptr.vmem [resolvable:$true] %s312
      %318 = dma.vmem_to_hbm [thread:$0]  %s313, 1664, %s3, [#allocation5], 128, 128, 8
    $region33: #{tpu_custom_call.1} parent=1 // pred_fallthru
      _
    // Predicated region
    $region34: #{tpu_custom_call.1} parent=1 // pred_check
      _
    $region35: #{tpu_custom_call.1} parent=1 // pred_check_branch
      %320 = sbr.rel (0) target = $region37
    $region36: #{tpu_custom_call.1} parent=1 // pred_region
      %321 = dma.done [#allocation5], 1664
    $region37: #{tpu_custom_call.1} parent=1 // pred_fallthru
      _
    %322 = vsyncpa [#allocation4], 1
    %323 = vsyncpa [#allocation7], 1
    %324 = vsyncpa [#allocation5], 1

</llo_original>
